<compile_context>
chip_gen: v6e
topology: v6e:2x2x1
jax: 0.10.0
libtpu: 0.0.40
codegen_flags: <defaults>
</compile_context>

<pallas_src>
import functools

import jax
import jax.numpy as jnp
from jax.experimental import pallas as pl
from jax.experimental.pallas import tpu as pltpu


def _attention_kernel(q_ref, k_ref, v_ref, lens_ref, ctx_ref, attn_ref):
    f32 = jnp.float32
    q = q_ref[...].astype(f32)          # (BN, K)
    k = k_ref[...].astype(f32)          # (T, BN, K)   time-major block
    v = v_ref[...].astype(f32)          # (T, BN, V)
    lens = lens_ref[...]                # (BN, 1) int32

    T, bn, _ = k.shape

    # energy[t, n] = sum_k key[t, n, k] * query[n, k]
    # VPU multiply + lane reduction; avoids 1-column MXU matmuls.
    energy_tb = jnp.sum(k * q[None, :, :], axis=-1)          # (T, BN)
    energy = jnp.transpose(energy_tb)                        # (BN, T)

    # masked_fill_(arange(T) >= lens, -1e9)
    t_idx = jax.lax.broadcasted_iota(jnp.int32, (bn, T), 1)  # (BN, T)
    energy = jnp.where(t_idx >= lens, jnp.float32(-1e9), energy)

    # numerically stable softmax over the source-length dimension (lanes)
    m = jnp.max(energy, axis=1, keepdims=True)               # (BN, 1)
    e = jnp.exp(energy - m)
    s = jnp.sum(e, axis=1, keepdims=True)                    # (BN, 1)
    r = pl.reciprocal(s, approx=True)                        # EUP slot
    r = r * (2.0 - s * r)                                    # one Newton step
    attn = e * r                                             # (BN, T)

    # context[n, v] = sum_t attn[n, t] * value[t, n, v]
    w_tb = jnp.transpose(attn)                               # (T, BN)
    ctx = jnp.sum(w_tb[:, :, None] * v, axis=0)              # (BN, V)

    attn_ref[...] = attn.astype(attn_ref.dtype)
    ctx_ref[...] = ctx.astype(ctx_ref.dtype)


def _round_up(x, m):
    return (x + m - 1) // m * m


@functools.partial(jax.jit, static_argnames=("block_n", "compute_dtype"))
def attention(query, key, value, lens, *, block_n=128,
              compute_dtype=jnp.float32):
    """query: (N,K); key: (T,N,K); value: (T,N,V); lens: (N,) int.

    Returns (context (N,V) f32, attention (N,T) f32), matching the PyTorch
    module. `compute_dtype` is the HBM/VMEM storage dtype for q/k/v (use
    jnp.bfloat16 on v6e/v7x to halve memory traffic); all mask/softmax math and
    accumulation stay in float32 inside the kernel.
    """
    query = jnp.asarray(query)
    key = jnp.asarray(key)
    value = jnp.asarray(value)
    lens = jnp.asarray(lens)

    T, N, K = key.shape
    V = value.shape[-1]

    # Batch tile: multiple of 8 (f32/bf16 sublane), capped by block_n.
    bn = min(_round_up(N, 8), _round_up(block_n, 8))
    n_pad = _round_up(N, bn)
    nb = n_pad // bn

    q = query.astype(compute_dtype)
    k = key.astype(compute_dtype)
    v = value.astype(compute_dtype)
    l = lens.astype(jnp.int32)

    if n_pad != N:
        pad = n_pad - N
        q = jnp.pad(q, ((0, pad), (0, 0)))
        k = jnp.pad(k, ((0, 0), (0, pad), (0, 0)))
        v = jnp.pad(v, ((0, 0), (0, pad), (0, 0)))
        l = jnp.pad(l, ((0, pad),))  # lens=0 rows are fully masked, then sliced off
    l = l.reshape(n_pad, 1)

    # Explicit scoped-VMEM budget: double-buffered input/output tiles + slack.
    elt = jnp.dtype(compute_dtype).itemsize
    block_bytes = (bn * K + T * bn * (K + V)) * elt + bn * (V + T + 1) * 4
    vmem_limit = int(min(64 * 1024 * 1024, max(32 * 1024 * 1024, 4 * block_bytes)))

    ctx, attn = pl.pallas_call(
        _attention_kernel,
        out_shape=(
            jax.ShapeDtypeStruct((n_pad, V), jnp.float32),
            jax.ShapeDtypeStruct((n_pad, T), jnp.float32),
        ),
        grid_spec=pltpu.PrefetchScalarGridSpec(
            num_scalar_prefetch=0,
            grid=(nb,),
            in_specs=[
                pl.BlockSpec((bn, K), lambda i: (i, 0)),          # query
                pl.BlockSpec((T, bn, K), lambda i: (0, i, 0)),    # key, native (T,N,K)
                pl.BlockSpec((T, bn, V), lambda i: (0, i, 0)),    # value, native (T,N,V)
                pl.BlockSpec((bn, 1), lambda i: (i, 0)),          # lens
            ],
            out_specs=(
                pl.BlockSpec((bn, V), lambda i: (i, 0)),          # context
                pl.BlockSpec((bn, T), lambda i: (i, 0)),          # attention
            ),
        ),
        compiler_params=pltpu.CompilerParams(
            dimension_semantics=("parallel",),
            vmem_limit_bytes=vmem_limit,
        ),
    )(q, k, v, l)

    if n_pad != N:
        ctx = ctx[:N]
        attn = attn[:N]
    return ctx, attn


def _reference(query, key, value, lens):
    key_t = jnp.transpose(key, (1, 0, 2))
    value_t = jnp.transpose(value, (1, 0, 2))
    energy = jnp.einsum("ntk,nk->nt", key_t, query)
    T = key_t.shape[1]
    mask = jnp.arange(T)[None, :] >= lens[:, None]
    energy = jnp.where(mask, -1e9, energy)
    attn = jax.nn.softmax(energy, axis=1)
    ctx = jnp.einsum("nt,ntv->nv", attn, value_t)
    return ctx, attn


if __name__ == "__main__":
    # Small shapes consistent with the module: T=8 timesteps, N=12 batch,
    # key_size=32, value_size=32.  block_n=8 -> grid of 2 batch tiles and
    # exercises the N -> 16 padding path.
    T, N, K, V = 8, 12, 32, 32
    root = jax.random.PRNGKey(0)
    kq, kk, kv, kl = jax.random.split(root, 4)

    query = jax.random.normal(kq, (N, K), dtype=jnp.float32)
    key = jax.random.normal(kk, (T, N, K), dtype=jnp.float32)
    value = jax.random.normal(kv, (T, N, V), dtype=jnp.float32)
    lens = jax.random.randint(kl, (N,), 1, T + 1).astype(jnp.int32)

    ref_ctx, ref_attn = _reference(query, key, value, lens)

    # float32 path
    ctx, attn = attention(query, key, value, lens, block_n=8)
    jax.block_until_ready((ctx, attn))
    assert ctx.shape == (N, V) and attn.shape == (N, T)
    assert jnp.allclose(ctx, ref_ctx, atol=1e-4, rtol=1e-4)
    assert jnp.allclose(attn, ref_attn, atol=1e-4, rtol=1e-4)
    assert jnp.allclose(jnp.sum(attn, axis=1), 1.0, atol=1e-4)

    # bf16 storage path (f32 math/accumulation inside the kernel)
    ctx_bf, attn_bf = attention(query, key, value, lens, block_n=8,
                                compute_dtype=jnp.bfloat16)
    jax.block_until_ready((ctx_bf, attn_bf))
    assert jnp.max(jnp.abs(attn_bf - ref_attn)) < 0.1
    assert jnp.max(jnp.abs(ctx_bf - ref_ctx)) < 0.3

    print("KERNEL_OK")
</pallas_src>

<mosaic_0001>
module attributes {stable_mosaic.version = 11 : i64} {
  func.func @_attention_kernel(%arg0: i32, %arg1: memref<8x32xf32, #tpu.memory_space<vmem>>, %arg2: memref<8x8x32xf32, #tpu.memory_space<vmem>>, %arg3: memref<8x8x32xf32, #tpu.memory_space<vmem>>, %arg4: memref<8x1xi32, #tpu.memory_space<vmem>>, %arg5: memref<8x32xf32, #tpu.memory_space<vmem>>, %arg6: memref<8x8xf32, #tpu.memory_space<vmem>>) attributes {dimension_semantics = [#tpu.dimension_semantics<parallel>], iteration_bounds = array<i64: 2>, scalar_prefetch = 0 : i64, scratch_operands = 0 : i64, tpu.core_type = #tpu.core_type<tc>, window_params = [{transform_indices = @transform_0, window_bounds = array<i64: 8, 32>}, {transform_indices = @transform_1, window_bounds = array<i64: 8, 8, 32>}, {transform_indices = @transform_2, window_bounds = array<i64: 8, 8, 32>}, {transform_indices = @transform_3, window_bounds = array<i64: 8, 1>}, {transform_indices = @transform_4, window_bounds = array<i64: 8, 32>}, {transform_indices = @transform_5, window_bounds = array<i64: 8, 8>}]} {
    %c0 = arith.constant 0 : index
    %c0_0 = arith.constant 0 : index
    %0 = vector.load %arg1[%c0, %c0_0] : memref<8x32xf32, #tpu.memory_space<vmem>>, vector<8x32xf32>
    %c0_1 = arith.constant 0 : index
    %c0_2 = arith.constant 0 : index
    %c0_3 = arith.constant 0 : index
    %1 = vector.load %arg2[%c0_1, %c0_2, %c0_3] : memref<8x8x32xf32, #tpu.memory_space<vmem>>, vector<8x8x32xf32>
    %c0_4 = arith.constant 0 : index
    %c0_5 = arith.constant 0 : index
    %c0_6 = arith.constant 0 : index
    %2 = vector.load %arg3[%c0_4, %c0_5, %c0_6] : memref<8x8x32xf32, #tpu.memory_space<vmem>>, vector<8x8x32xf32>
    %c0_7 = arith.constant 0 : index
    %c0_8 = arith.constant 0 : index
    %3 = vector.load %arg4[%c0_7, %c0_8] : memref<8x1xi32, #tpu.memory_space<vmem>>, vector<8x1xi32>
    %4 = vector.shape_cast %0 : vector<8x32xf32> to vector<1x8x32xf32>
    %5 = vector.broadcast %4 : vector<1x8x32xf32> to vector<8x8x32xf32>
    %6 = arith.mulf %1, %5 : vector<8x8x32xf32>
    %cst = arith.constant dense<0.000000e+00> : vector<8x8xf32>
    %7 = vector.multi_reduction <add>, %6, %cst [2] : vector<8x8x32xf32> to vector<8x8xf32>
    %8 = tpu.transpose %7, [1, 0] : vector<8x8xf32> -> vector<8x8xf32>
    %9 = tpu.iota {dimensions = array<i32: 1>} : vector<8x8xi32>
    %10 = vector.broadcast %3 : vector<8x1xi32> to vector<8x8xi32>
    %11 = arith.cmpi sge, %9, %10 : vector<8x8xi32>
    %cst_9 = arith.constant -1.000000e+09 : f32
    %12 = vector.broadcast %cst_9 : f32 to vector<8x8xf32>
    %13 = arith.select %11, %12, %8 : vector<8x8xi1>, vector<8x8xf32>
    %cst_10 = arith.constant dense<0xFF800000> : vector<8xf32>
    %14 = vector.multi_reduction <maximumf>, %13, %cst_10 [1] : vector<8x8xf32> to vector<8xf32>
    %15 = vector.shape_cast %14 : vector<8xf32> to vector<8x1xf32>
    %16 = vector.broadcast %15 : vector<8x1xf32> to vector<8x8xf32>
    %17 = arith.subf %13, %16 : vector<8x8xf32>
    %18 = math.exp %17 : vector<8x8xf32>
    %cst_11 = arith.constant dense<0.000000e+00> : vector<8xf32>
    %19 = vector.multi_reduction <add>, %18, %cst_11 [1] : vector<8x8xf32> to vector<8xf32>
    %20 = vector.shape_cast %19 : vector<8xf32> to vector<8x1xf32>
    %21 = tpu.reciprocal %20 {approx = true} : vector<8x1xf32> -> vector<8x1xf32>
    %22 = arith.mulf %20, %21 : vector<8x1xf32>
    %cst_12 = arith.constant 2.000000e+00 : f32
    %23 = vector.broadcast %cst_12 : f32 to vector<8x1xf32>
    %24 = arith.subf %23, %22 : vector<8x1xf32>
    %25 = arith.mulf %21, %24 : vector<8x1xf32>
    %26 = vector.broadcast %25 : vector<8x1xf32> to vector<8x8xf32>
    %27 = arith.mulf %18, %26 : vector<8x8xf32>
    %28 = tpu.transpose %27, [1, 0] : vector<8x8xf32> -> vector<8x8xf32>
    %29 = vector.shape_cast %28 : vector<8x8xf32> to vector<8x8x1xf32>
    %30 = vector.broadcast %29 : vector<8x8x1xf32> to vector<8x8x32xf32>
    %31 = arith.mulf %30, %2 : vector<8x8x32xf32>
    %cst_13 = arith.constant dense<0.000000e+00> : vector<8x32xf32>
    %32 = vector.multi_reduction <add>, %31, %cst_13 [0] : vector<8x8x32xf32> to vector<8x32xf32>
    %c0_14 = arith.constant 0 : index
    %c0_15 = arith.constant 0 : index
    %33 = vector.load %arg6[%c0_14, %c0_15] : memref<8x8xf32, #tpu.memory_space<vmem>>, vector<8x8xf32>
    tpu.vector_store %arg6[%c0_14, %c0_15], %27 {strides = array<i32>} : memref<8x8xf32, #tpu.memory_space<vmem>>, vector<8x8xf32>,
    %c0_16 = arith.constant 0 : index
    %c0_17 = arith.constant 0 : index
    %34 = vector.load %arg5[%c0_16, %c0_17] : memref<8x32xf32, #tpu.memory_space<vmem>>, vector<8x32xf32>
    tpu.vector_store %arg5[%c0_16, %c0_17], %32 {strides = array<i32>} : memref<8x32xf32, #tpu.memory_space<vmem>>, vector<8x32xf32>,
    return
  }
  func.func @transform_0(%arg0: i32) -> (i32, i32) {
    %c0_i32 = arith.constant 0 : i32
    %c0_i32_0 = arith.constant 0 : i32
    return %arg0, %c0_i32 : i32, i32
  }
  func.func @transform_1(%arg0: i32) -> (i32, i32, i32) {
    %c0_i32 = arith.constant 0 : i32
    %c0_i32_0 = arith.constant 0 : i32
    %c0_i32_1 = arith.constant 0 : i32
    return %c0_i32, %arg0, %c0_i32_0 : i32, i32, i32
  }
  func.func @transform_2(%arg0: i32) -> (i32, i32, i32) {
    %c0_i32 = arith.constant 0 : i32
    %c0_i32_0 = arith.constant 0 : i32
    %c0_i32_1 = arith.constant 0 : i32
    return %c0_i32, %arg0, %c0_i32_0 : i32, i32, i32
  }
  func.func @transform_3(%arg0: i32) -> (i32, i32) {
    %c0_i32 = arith.constant 0 : i32
    %c0_i32_0 = arith.constant 0 : i32
    return %arg0, %c0_i32 : i32, i32
  }
  func.func @transform_4(%arg0: i32) -> (i32, i32) {
    %c0_i32 = arith.constant 0 : i32
    %c0_i32_0 = arith.constant 0 : i32
    return %arg0, %c0_i32 : i32, i32
  }
  func.func @transform_5(%arg0: i32) -> (i32, i32) {
    %c0_i32 = arith.constant 0 : i32
    %c0_i32_0 = arith.constant 0 : i32
    return %arg0, %c0_i32 : i32, i32
  }
}

</mosaic_0001>

<llo_original>
// kernel: attention.1
$region0: #{attention.1}
  #allocation0 [shape = 'u32[]', space=smem, size = 0x4, offset = 0x4, fixed_abs, tag = 'smem constant byte address 0x4 - core index']
  #allocation1 [shape = 'u32[144,128]{1,0:T(1,128)}', space=vmem, size = 0x12000, scoped, tag = 'internal scratch']
  %s0 = inlined_call_operand.vmem [shape: f32[16,32], index: 0, kind: input, shape index: {}]
  %s1 = inlined_call_operand.vmem [shape: f32[8,16,32], index: 1, kind: input, shape index: {}]
  %s2 = inlined_call_operand.vmem [shape: f32[8,16,32], index: 2, kind: input, shape index: {}]
  %s3 = inlined_call_operand.vmem [shape: s32[16,1], index: 3, kind: input, shape index: {}]
  %s4 = inlined_call_operand.hbm [shape: f32[16,32], index: 4, kind: output, shape index: {0}]
  %s5 = inlined_call_operand.vmem [shape: f32[16,8], index: 5, kind: output, shape index: {1}]
  %6 = xla_tuple %s4, %s5
  %s7 = sld [smem:[#allocation0]]
  $region133: #{attention.1} parent=0
    _
  %s9 = ssub.s32 1, %s7
  %s10 = scalar_select 0, %s9, %s7
  $region1: #{attention.1} parent=0
    #allocation2 [shape = 'u8[65536]{0}', space=vmem, size = 0x10000, scoped, tag = 'input window, operand 1']
    #allocation3 [shape = 'u8[65536]{0}', space=vmem, size = 0x10000, scoped, tag = 'input window, operand 2']
    #allocation4 [shape = 'u8[8192]{0}', space=vmem, size = 0x2000, scoped, tag = 'output window, operand 0']
    #allocation5 [shape = 's32[2]{0}', space=sflag, size = 0x8, scoped, tag = 'scoped memory for attention.1']
    %11 = vsyncpa [#allocation5], 0
    %s12 = scalar_lea.sflag [#allocation5], 1
    %13 = vsyncpa %s12, 0
    loop: start=0, step=1, limit=4
    $region2: #{attention.1} parent=1 // loop_pre_header
      _
    $region3: #{attention.1} parent=1 // loop_header
      %s15 = sphi 0, %s19
      %p16 = scmp.ge.s32.totalorder %s15, 4
      %s25 = sphi 0, %s27
      %s28 = sphi 0, %s25
      %s29 = sphi 0, %s28
      %s45 = sphi 0, %s29
      %s51 = sphi 0, %s53
      %s54 = sphi 0, %s51
      %s55 = sphi 0, %s54
      %s71 = sphi 0, %s55
      %s77 = sphi 0, %s79
      %s80 = sphi 0, %s77
      %s81 = sphi 0, %s80
      %s97 = sphi 0, %s81
      %s103 = sphi 0, %s105
      %s106 = sphi 0, %s103
      %s107 = sphi 0, %s106
      %s123 = sphi 0, %s107
      %s129 = sphi 0, %s131
      %s132 = sphi 0, %s129
      %s133 = sphi 0, %s132
      %s149 = sphi 0, %s133
      %s155 = sphi 0, %s157
      %s158 = sphi 0, %s155
      %s159 = sphi 0, %s158
      %s175 = sphi 0, %s159
    $region4: #{attention.1} parent=1 // loop_header_branch
      %18 = sbr.rel (%p16) target = $region8
    $region5: #{attention.1} parent=1 // loop_body
      %s20 = ssub.s32 %s15, 1
      %s21 = ssub.s32 %s15, 2
      %s22 = sadd.s32 %s15, 1
      %s23 = ssub.s32 %s15, %s22
      %p24 = scmp.eq.s32.totalorder %s23, 0
      %s26 = sadd.s32 %s25, 1
      %s27 = scalar_select %p24, %s25, %s26
      %p30 = pneg %p24
      %p31 = scmp.eq.s32.totalorder %s15, 1
      %p32 = por %p30, %p31
      %p33 = scmp.ne.s32.totalorder %s25, %s28
      %p34 = scmp.eq.s32.totalorder %s15, 0
      %p35 = por %p33, %p34
      %p36 = scmp.ne.s32.totalorder %s25, %s28
      %p37 = scmp.eq.s32.totalorder %s20, 1
      %p38 = por %p36, %p37
      %p39 = scmp.ne.s32.totalorder %s28, %s29
      %p40 = scmp.eq.s32.totalorder %s20, 0
      %p41 = por %p39, %p40
      %p42 = scmp.ne.s32.totalorder %s28, %s29
      %p43 = scmp.eq.s32.totalorder %s21, 1
      %p44 = por %p42, %p43
      %p46 = scmp.ne.s32.totalorder %s29, %s45
      %p47 = scmp.eq.s32.totalorder %s21, 0
      %p48 = por %p46, %p47
      %s49 = ssub.s32 %s15, %s22
      %p50 = scmp.eq.s32.totalorder %s49, 0
      %s52 = sadd.s32 %s51, 1
      %s53 = scalar_select %p50, %s51, %s52
      %p56 = pneg %p50
      %p57 = scmp.eq.s32.totalorder %s15, 1
      %p58 = por %p56, %p57
      %p59 = scmp.ne.s32.totalorder %s51, %s54
      %p60 = scmp.eq.s32.totalorder %s15, 0
      %p61 = por %p59, %p60
      %p62 = scmp.ne.s32.totalorder %s51, %s54
      %p63 = scmp.eq.s32.totalorder %s20, 1
      %p64 = por %p62, %p63
      %p65 = scmp.ne.s32.totalorder %s54, %s55
      %p66 = scmp.eq.s32.totalorder %s20, 0
      %p67 = por %p65, %p66
      %p68 = scmp.ne.s32.totalorder %s54, %s55
      %p69 = scmp.eq.s32.totalorder %s21, 1
      %p70 = por %p68, %p69
      %p72 = scmp.ne.s32.totalorder %s55, %s71
      %p73 = scmp.eq.s32.totalorder %s21, 0
      %p74 = por %p72, %p73
      %s75 = ssub.s32 %s15, %s22
      %p76 = scmp.eq.s32.totalorder %s75, 0
      %s78 = sadd.s32 %s77, 1
      %s79 = scalar_select %p76, %s77, %s78
      %p82 = pneg %p76
      %p83 = scmp.eq.s32.totalorder %s15, 1
      %p84 = por %p82, %p83
      %p85 = scmp.ne.s32.totalorder %s77, %s80
      %p86 = scmp.eq.s32.totalorder %s15, 0
      %p87 = por %p85, %p86
      %p88 = scmp.ne.s32.totalorder %s77, %s80
      %p89 = scmp.eq.s32.totalorder %s20, 1
      %p90 = por %p88, %p89
      %p91 = scmp.ne.s32.totalorder %s80, %s81
      %p92 = scmp.eq.s32.totalorder %s20, 0
      %p93 = por %p91, %p92
      %p94 = scmp.ne.s32.totalorder %s80, %s81
      %p95 = scmp.eq.s32.totalorder %s21, 1
      %p96 = por %p94, %p95
      %p98 = scmp.ne.s32.totalorder %s81, %s97
      %p99 = scmp.eq.s32.totalorder %s21, 0
      %p100 = por %p98, %p99
      %s101 = ssub.s32 %s15, %s22
      %p102 = scmp.eq.s32.totalorder %s101, 0
      %s104 = sadd.s32 %s103, 1
      %s105 = scalar_select %p102, %s103, %s104
      %p108 = pneg %p102
      %p109 = scmp.eq.s32.totalorder %s15, 1
      %p110 = por %p108, %p109
      %p111 = scmp.ne.s32.totalorder %s103, %s106
      %p112 = scmp.eq.s32.totalorder %s15, 0
      %p113 = por %p111, %p112
      %p114 = scmp.ne.s32.totalorder %s103, %s106
      %p115 = scmp.eq.s32.totalorder %s20, 1
      %p116 = por %p114, %p115
      %p117 = scmp.ne.s32.totalorder %s106, %s107
      %p118 = scmp.eq.s32.totalorder %s20, 0
      %p119 = por %p117, %p118
      %p120 = scmp.ne.s32.totalorder %s106, %s107
      %p121 = scmp.eq.s32.totalorder %s21, 1
      %p122 = por %p120, %p121
      %p124 = scmp.ne.s32.totalorder %s107, %s123
      %p125 = scmp.eq.s32.totalorder %s21, 0
      %p126 = por %p124, %p125
      %s127 = ssub.s32 %s15, %s22
      %p128 = scmp.eq.s32.totalorder %s127, 0
      %s130 = sadd.s32 %s129, 1
      %s131 = scalar_select %p128, %s129, %s130
      %p134 = pneg %p128
      %p135 = scmp.eq.s32.totalorder %s15, 1
      %p136 = por %p134, %p135
      %p137 = scmp.ne.s32.totalorder %s129, %s132
      %p138 = scmp.eq.s32.totalorder %s15, 0
      %p139 = por %p137, %p138
      %p140 = scmp.ne.s32.totalorder %s129, %s132
      %p141 = scmp.eq.s32.totalorder %s20, 1
      %p142 = por %p140, %p141
      %p143 = scmp.ne.s32.totalorder %s132, %s133
      %p144 = scmp.eq.s32.totalorder %s20, 0
      %p145 = por %p143, %p144
      %p146 = scmp.ne.s32.totalorder %s132, %s133
      %p147 = scmp.eq.s32.totalorder %s21, 1
      %p148 = por %p146, %p147
      %p150 = scmp.ne.s32.totalorder %s133, %s149
      %p151 = scmp.eq.s32.totalorder %s21, 0
      %p152 = por %p150, %p151
      %s153 = ssub.s32 %s15, %s22
      %p154 = scmp.eq.s32.totalorder %s153, 0
      %s156 = sadd.s32 %s155, 1
      %s157 = scalar_select %p154, %s155, %s156
      %p160 = pneg %p154
      %p161 = scmp.eq.s32.totalorder %s15, 1
      %p162 = por %p160, %p161
      %p163 = scmp.ne.s32.totalorder %s155, %s158
      %p164 = scmp.eq.s32.totalorder %s15, 0
      %p165 = por %p163, %p164
      %p166 = scmp.ne.s32.totalorder %s155, %s158
      %p167 = scmp.eq.s32.totalorder %s20, 1
      %p168 = por %p166, %p167
      %p169 = scmp.ne.s32.totalorder %s158, %s159
      %p170 = scmp.eq.s32.totalorder %s20, 0
      %p171 = por %p169, %p170
      %p172 = scmp.ne.s32.totalorder %s158, %s159
      %p173 = scmp.eq.s32.totalorder %s21, 1
      %p174 = por %p172, %p173
      %p176 = scmp.ne.s32.totalorder %s159, %s175
      %p177 = scmp.eq.s32.totalorder %s21, 0
      %p178 = por %p176, %p177
      %p179 = scmp.le.s32.totalorder 1, %s15
      %p180 = scmp.lt.s32.totalorder %s15, 3
      %p181 = pnand %p179, %p180
      %p182 = pneg %p181
      // Predicated region
      $region9: #{attention.1} parent=5 // pred_check
        _
      $region10: #{attention.1} parent=5 // pred_check_branch
        %184 = sbr.rel (%p181) target = $region12
      $region11: #{attention.1} parent=5 // pred_region
        %s185 = ssub.s32 %s15, 1
      $region12: #{attention.1} parent=5 // pred_fallthru
        _
      %p186 = scmp.lt.s32.totalorder %s15, 2
      // Predicated region
      $region13: #{attention.1} parent=5 // pred_check
        %p187 = pneg %p186
      $region14: #{attention.1} parent=5 // pred_check_branch
        %189 = sbr.rel (%p187) target = $region16
      $region15: #{attention.1} parent=5 // pred_region
        // Predicated region
        $region17: #{attention.1} parent=15 // pred_check
          %p190 = pneg %p35
        $region18: #{attention.1} parent=15 // pred_check_branch
          %192 = sbr.rel (%p190) target = $region20
        $region19: #{attention.1} parent=15 // pred_region
          %p193 = scmp.lt.s32.totalorder %s15, 1
          %s194 = scalar_select %p193, %s15, 1
          %s195 = smul.addr %s194, 8
          %s196 = scalar_lea.vmem %s0, %s195
        $region20: #{attention.1} parent=15 // pred_fallthru
          _
        // Predicated region
        $region21: #{attention.1} parent=15 // pred_check
          %p197 = pneg %p61
        $region22: #{attention.1} parent=15 // pred_check_branch
          %199 = sbr.rel (%p197) target = $region24
        $region23: #{attention.1} parent=15 // pred_region
          %s200 = sand.u32 %s51, 1
          %s201 = sand.u32 %s51, 1
          %s202 = smul.addr %s201, 64
          %s203 = scalar_lea.vmem [#allocation2], %s202
          %s204 = smul.addr %s15, 8
          %s205 = scalar_lea.vmem %s1, %s204
          // Predicated region
          $region25: #{attention.1} parent=23 // pred_check
            _
          $region26: #{attention.1} parent=23 // pred_check_branch
            %207 = sbr.rel (0) target = $region28
          $region27: #{attention.1} parent=23 // pred_region
            // Predicated region
            $region29: #{attention.1} parent=27 // pred_check
              _
            $region30: #{attention.1} parent=27 // pred_check_branch
              %209 = sbr.rel (0) target = $region32
            $region31: #{attention.1} parent=27 // pred_region
              // Predicated region
              $region44: #{attention.1} parent=31 // pred_check
                _
              $region45: #{attention.1} parent=31 // pred_check_branch
                %239 = sbr.rel (0) target = $region47
              $region46: #{attention.1} parent=31 // pred_region
                loop: start=0, step=1, limit=1
                $region48: #{attention.1} parent=46 // loop_pre_header
                  _
                $region49: #{attention.1} parent=46 // loop_header
                  %s241 = sphi 0, %s245
                  %p242 = scmp.ge.s32.totalorder %s241, 1
                  %s246 = sphi %s205, %s205
                  %s247 = sphi %s203, %s203
                $region50: #{attention.1} parent=46 // loop_header_branch
                  %244 = sbr.rel (%p242) target = $region54
                $region51: #{attention.1} parent=46 // loop_body
                  %v248 = vld [vmem:[%s246] sm:$0xff]
                  %249 = vst [vmem:[%s247] sm:$0xff] %v248
                  %v250 = vld [vmem:[%s246 + $0x10] sm:$0xff]
                  %251 = vst [vmem:[%s247 + $0x8] sm:$0xff] %v250
                  %v252 = vld [vmem:[%s246 + $0x20] sm:$0xff]
                  %253 = vst [vmem:[%s247 + $0x10] sm:$0xff] %v252
                  %v254 = vld [vmem:[%s246 + $0x30] sm:$0xff]
                  %255 = vst [vmem:[%s247 + $0x18] sm:$0xff] %v254
                  %v256 = vld [vmem:[%s246 + $0x40] sm:$0xff]
                  %257 = vst [vmem:[%s247 + $0x20] sm:$0xff] %v256
                  %v258 = vld [vmem:[%s246 + $0x50] sm:$0xff]
                  %259 = vst [vmem:[%s247 + $0x28] sm:$0xff] %v258
                  %v260 = vld [vmem:[%s246 + $0x60] sm:$0xff]
                  %261 = vst [vmem:[%s247 + $0x30] sm:$0xff] %v260
                  %v262 = vld [vmem:[%s246 + $0x70] sm:$0xff]
                  %263 = vst [vmem:[%s247 + $0x38] sm:$0xff] %v262
                $region52: #{attention.1} parent=46 // loop_footer
                  %s245 = sadd.s32 1, %s241
                $region53: #{attention.1} parent=46 // loop_footer_branch
                  %240 = sbr.rel target = $region49
                $region54: #{attention.1} parent=46 // loop_exit
                  _
              $region47: #{attention.1} parent=31 // pred_fallthru
                _
              // Predicated region
              $region55: #{attention.1} parent=31 // pred_check
                _
              $region56: #{attention.1} parent=31 // pred_check_branch
                %265 = sbr.rel target = $region58
              $region57: #{attention.1} parent=31 // pred_region
                _
              $region58: #{attention.1} parent=31 // pred_fallthru
                _
            $region32: #{attention.1} parent=27 // pred_fallthru
              _
            // Predicated region
            $region33: #{attention.1} parent=27 // pred_check
              _
            $region34: #{attention.1} parent=27 // pred_check_branch
              %211 = sbr.rel target = $region36
            $region35: #{attention.1} parent=27 // pred_region
              %s213 = ssub.s32 256, 1
              loop: start=0, step=1, limit=1
              $region37: #{attention.1} parent=35 // loop_pre_header
                _
              $region38: #{attention.1} parent=35 // loop_header
                %s215 = sphi 0, %s219
                %p216 = scmp.ge.s32.totalorder %s215, 1
                %s220 = sphi %s205, %s205
                %s221 = sphi %s203, %s203
              $region39: #{attention.1} parent=35 // loop_header_branch
                %218 = sbr.rel (%p216) target = $region43
              $region40: #{attention.1} parent=35 // loop_body
                %v222 = vld [vmem:[%s220] sm:%s213]
                %223 = vst [vmem:[%s221] sm:%s213] %v222
                %v224 = vld [vmem:[%s220 + $0x10] sm:%s213]
                %225 = vst [vmem:[%s221 + $0x8] sm:%s213] %v224
                %v226 = vld [vmem:[%s220 + $0x20] sm:%s213]
                %227 = vst [vmem:[%s221 + $0x10] sm:%s213] %v226
                %v228 = vld [vmem:[%s220 + $0x30] sm:%s213]
                %229 = vst [vmem:[%s221 + $0x18] sm:%s213] %v228
                %v230 = vld [vmem:[%s220 + $0x40] sm:%s213]
                %231 = vst [vmem:[%s221 + $0x20] sm:%s213] %v230
                %v232 = vld [vmem:[%s220 + $0x50] sm:%s213]
                %233 = vst [vmem:[%s221 + $0x28] sm:%s213] %v232
                %v234 = vld [vmem:[%s220 + $0x60] sm:%s213]
                %235 = vst [vmem:[%s221 + $0x30] sm:%s213] %v234
                %v236 = vld [vmem:[%s220 + $0x70] sm:%s213]
                %237 = vst [vmem:[%s221 + $0x38] sm:%s213] %v236
              $region41: #{attention.1} parent=35 // loop_footer
                %s219 = sadd.s32 1, %s215
              $region42: #{attention.1} parent=35 // loop_footer_branch
                %214 = sbr.rel target = $region38
              $region43: #{attention.1} parent=35 // loop_exit
                _
            $region36: #{attention.1} parent=27 // pred_fallthru
              _
          $region28: #{attention.1} parent=23 // pred_fallthru
            _
          %266 = vnop
        $region24: #{attention.1} parent=15 // pred_fallthru
          _
        // Predicated region
        $region59: #{attention.1} parent=15 // pred_check
          %p267 = pneg %p87
        $region60: #{attention.1} parent=15 // pred_check_branch
          %269 = sbr.rel (%p267) target = $region62
        $region61: #{attention.1} parent=15 // pred_region
          %s270 = sand.u32 %s77, 1
          %s271 = sand.u32 %s77, 1
          %s272 = smul.addr %s271, 64
          %s273 = scalar_lea.vmem [#allocation3], %s272
          %s274 = smul.addr %s15, 8
          %s275 = scalar_lea.vmem %s2, %s274
          // Predicated region
          $region63: #{attention.1} parent=61 // pred_check
            _
          $region64: #{attention.1} parent=61 // pred_check_branch
            %277 = sbr.rel (0) target = $region66
          $region65: #{attention.1} parent=61 // pred_region
            // Predicated region
            $region67: #{attention.1} parent=65 // pred_check
              _
            $region68: #{attention.1} parent=65 // pred_check_branch
              %279 = sbr.rel (0) target = $region70
            $region69: #{attention.1} parent=65 // pred_region
              // Predicated region
              $region82: #{attention.1} parent=69 // pred_check
                _
              $region83: #{attention.1} parent=69 // pred_check_branch
                %309 = sbr.rel (0) target = $region85
              $region84: #{attention.1} parent=69 // pred_region
                loop: start=0, step=1, limit=1
                $region86: #{attention.1} parent=84 // loop_pre_header
                  _
                $region87: #{attention.1} parent=84 // loop_header
                  %s311 = sphi 0, %s315
                  %p312 = scmp.ge.s32.totalorder %s311, 1
                  %s316 = sphi %s275, %s275
                  %s317 = sphi %s273, %s273
                $region88: #{attention.1} parent=84 // loop_header_branch
                  %314 = sbr.rel (%p312) target = $region92
                $region89: #{attention.1} parent=84 // loop_body
                  %v318 = vld [vmem:[%s316] sm:$0xff]
                  %319 = vst [vmem:[%s317] sm:$0xff] %v318
                  %v320 = vld [vmem:[%s316 + $0x10] sm:$0xff]
                  %321 = vst [vmem:[%s317 + $0x8] sm:$0xff] %v320
                  %v322 = vld [vmem:[%s316 + $0x20] sm:$0xff]
                  %323 = vst [vmem:[%s317 + $0x10] sm:$0xff] %v322
                  %v324 = vld [vmem:[%s316 + $0x30] sm:$0xff]
                  %325 = vst [vmem:[%s317 + $0x18] sm:$0xff] %v324
                  %v326 = vld [vmem:[%s316 + $0x40] sm:$0xff]
                  %327 = vst [vmem:[%s317 + $0x20] sm:$0xff] %v326
                  %v328 = vld [vmem:[%s316 + $0x50] sm:$0xff]
                  %329 = vst [vmem:[%s317 + $0x28] sm:$0xff] %v328
                  %v330 = vld [vmem:[%s316 + $0x60] sm:$0xff]
                  %331 = vst [vmem:[%s317 + $0x30] sm:$0xff] %v330
                  %v332 = vld [vmem:[%s316 + $0x70] sm:$0xff]
                  %333 = vst [vmem:[%s317 + $0x38] sm:$0xff] %v332
                $region90: #{attention.1} parent=84 // loop_footer
                  %s315 = sadd.s32 1, %s311
                $region91: #{attention.1} parent=84 // loop_footer_branch
                  %310 = sbr.rel target = $region87
                $region92: #{attention.1} parent=84 // loop_exit
                  _
              $region85: #{attention.1} parent=69 // pred_fallthru
                _
              // Predicated region
              $region93: #{attention.1} parent=69 // pred_check
                _
              $region94: #{attention.1} parent=69 // pred_check_branch
                %335 = sbr.rel target = $region96
              $region95: #{attention.1} parent=69 // pred_region
                _
              $region96: #{attention.1} parent=69 // pred_fallthru
                _
            $region70: #{attention.1} parent=65 // pred_fallthru
              _
            // Predicated region
            $region71: #{attention.1} parent=65 // pred_check
              _
            $region72: #{attention.1} parent=65 // pred_check_branch
              %281 = sbr.rel target = $region74
            $region73: #{attention.1} parent=65 // pred_region
              %s283 = ssub.s32 256, 1
              loop: start=0, step=1, limit=1
              $region75: #{attention.1} parent=73 // loop_pre_header
                _
              $region76: #{attention.1} parent=73 // loop_header
                %s285 = sphi 0, %s289
                %p286 = scmp.ge.s32.totalorder %s285, 1
                %s290 = sphi %s275, %s275
                %s291 = sphi %s273, %s273
              $region77: #{attention.1} parent=73 // loop_header_branch
                %288 = sbr.rel (%p286) target = $region81
              $region78: #{attention.1} parent=73 // loop_body
                %v292 = vld [vmem:[%s290] sm:%s283]
                %293 = vst [vmem:[%s291] sm:%s283] %v292
                %v294 = vld [vmem:[%s290 + $0x10] sm:%s283]
                %295 = vst [vmem:[%s291 + $0x8] sm:%s283] %v294
                %v296 = vld [vmem:[%s290 + $0x20] sm:%s283]
                %297 = vst [vmem:[%s291 + $0x10] sm:%s283] %v296
                %v298 = vld [vmem:[%s290 + $0x30] sm:%s283]
                %299 = vst [vmem:[%s291 + $0x18] sm:%s283] %v298
                %v300 = vld [vmem:[%s290 + $0x40] sm:%s283]
                %301 = vst [vmem:[%s291 + $0x20] sm:%s283] %v300
                %v302 = vld [vmem:[%s290 + $0x50] sm:%s283]
                %303 = vst [vmem:[%s291 + $0x28] sm:%s283] %v302
                %v304 = vld [vmem:[%s290 + $0x60] sm:%s283]
                %305 = vst [vmem:[%s291 + $0x30] sm:%s283] %v304
                %v306 = vld [vmem:[%s290 + $0x70] sm:%s283]
                %307 = vst [vmem:[%s291 + $0x38] sm:%s283] %v306
              $region79: #{attention.1} parent=73 // loop_footer
                %s289 = sadd.s32 1, %s285
              $region80: #{attention.1} parent=73 // loop_footer_branch
                %284 = sbr.rel target = $region76
              $region81: #{attention.1} parent=73 // loop_exit
                _
            $region74: #{attention.1} parent=65 // pred_fallthru
              _
          $region66: #{attention.1} parent=61 // pred_fallthru
            _
          %336 = vnop
        $region62: #{attention.1} parent=15 // pred_fallthru
          _
        // Predicated region
        $region97: #{attention.1} parent=15 // pred_check
          %p337 = pneg %p113
        $region98: #{attention.1} parent=15 // pred_check_branch
          %339 = sbr.rel (%p337) target = $region100
        $region99: #{attention.1} parent=15 // pred_region
          %p340 = scmp.lt.s32.totalorder %s15, 1
          %s341 = scalar_select %p340, %s15, 1
          %s342 = smul.addr %s341, 8
          %s343 = scalar_lea.vmem %s3, %s342
        $region100: #{attention.1} parent=15 // pred_fallthru
          _
      $region16: #{attention.1} parent=5 // pred_fallthru
        _
      %p344 = scmp.le.s32.totalorder 1, %s15
      %p345 = scmp.lt.s32.totalorder %s15, 3
      %p346 = pnand %p344, %p345
      %p347 = pneg %p346
      // Predicated region
      $region101: #{attention.1} parent=5 // pred_check
        _
      $region102: #{attention.1} parent=5 // pred_check_branch
        %349 = sbr.rel (%p346) target = $region104
      $region103: #{attention.1} parent=5 // pred_region
        %s350 = ssub.s32 %s15, 1
        %s351 = sand.u32 %s54, 1
        %s352 = sand.u32 %s54, 1
        %s353 = smul.addr %s352, 64
        %s354 = scalar_lea.vmem [#allocation2], %s353
        // Predicated region
        $region105: #{attention.1} parent=103 // pred_check
          %p355 = pneg %p67
        $region106: #{attention.1} parent=103 // pred_check_branch
          %357 = sbr.rel (%p355) target = $region108
        $region107: #{attention.1} parent=103 // pred_region
          _
        $region108: #{attention.1} parent=103 // pred_fallthru
          _
        %s358 = sand.u32 %s80, 1
        %s359 = sand.u32 %s80, 1
        %s360 = smul.addr %s359, 64
        %s361 = scalar_lea.vmem [#allocation3], %s360
        // Predicated region
        $region109: #{attention.1} parent=103 // pred_check
          %p362 = pneg %p93
        $region110: #{attention.1} parent=103 // pred_check_branch
          %364 = sbr.rel (%p362) target = $region112
        $region111: #{attention.1} parent=103 // pred_region
          _
        $region112: #{attention.1} parent=103 // pred_fallthru
          _
        %p365 = scmp.lt.s32.totalorder %s20, 1
        %s366 = scalar_select %p365, %s20, 1
        %s367 = smul.addr %s366, 8
        %s368 = scalar_lea.vmem %s0, %s367
        %p369 = pneg %p41
        %p370 = pneg %p38
        %s371 = sand.u32 %s54, 1
        %s372 = sand.u32 %s54, 1
        %s373 = smul.addr %s372, 64
        %s374 = scalar_lea.vmem [#allocation2], %s373
        %p375 = pneg %p67
        %p376 = pneg %p64
        %s377 = sand.u32 %s80, 1
        %s378 = sand.u32 %s80, 1
        %s379 = smul.addr %s378, 64
        %s380 = scalar_lea.vmem [#allocation3], %s379
        %p381 = pneg %p93
        %p382 = pneg %p90
        %p383 = scmp.lt.s32.totalorder %s20, 1
        %s384 = scalar_select %p383, %s20, 1
        %s385 = smul.addr %s384, 8
        %s386 = scalar_lea.vmem %s3, %s385
        %p387 = pneg %p119
        %p388 = pneg %p116
        %p389 = pneg %p145
        %p390 = pneg %p142
        %s391 = sand.u32 %s132, 1
        %s392 = scalar_lea.sflag [#allocation5], %s391
        %s393 = sand.u32 %s132, 1
        %s394 = smul.addr %s393, 8
        %s395 = scalar_lea.vmem [#allocation4], %s394
        %p396 = pneg %p171
        %p397 = pneg %p168
        %p398 = scmp.lt.s32.totalorder %s20, 1
        %s399 = scalar_select %p398, %s20, 1
        %s400 = smul.addr %s399, 8
        %s401 = scalar_lea.vmem %s5, %s400
        %p402 = scmp.lt.s32.totalorder %s20, 1
        %s403 = scalar_select %p402, %s20, 1
        %s404 = smul.addr %s403, 8
        %s405 = scalar_lea.vmem %s0, %s404
        %p406 = scmp.lt.s32.totalorder %s20, 1
        %s407 = scalar_select %p406, %s20, 1
        %s408 = smul.addr %s407, 8
        %s409 = scalar_lea.vmem %s3, %s408
        %p410 = scmp.lt.s32.totalorder %s20, 1
        %s411 = scalar_select %p410, %s20, 1
        %s412 = smul.addr %s411, 8
        %s413 = scalar_lea.vmem %s5, %s412
        %v414 = vld [vmem:[%s405] sm:$0xff]
        %v415 = vld [vmem:[%s354] sm:$0xff]
        %v416 = vld [vmem:[%s354 + $0x8] sm:$0xff]
        %v417 = vld [vmem:[%s354 + $0x10] sm:$0xff]
        %v418 = vld [vmem:[%s354 + $0x18] sm:$0xff]
        %v419 = vld [vmem:[%s354 + $0x20] sm:$0xff]
        %v420 = vld [vmem:[%s354 + $0x28] sm:$0xff]
        %v421 = vld [vmem:[%s354 + $0x30] sm:$0xff]
        %v422 = vld [vmem:[%s354 + $0x38] sm:$0xff]
        %v423 = vld [vmem:[%s361] sm:$0xff]
        %v424 = vld [vmem:[%s361 + $0x8] sm:$0xff]
        %v425 = vld [vmem:[%s361 + $0x10] sm:$0xff]
        %v426 = vld [vmem:[%s361 + $0x18] sm:$0xff]
        %v427 = vld [vmem:[%s361 + $0x20] sm:$0xff]
        %v428 = vld [vmem:[%s361 + $0x28] sm:$0xff]
        %v429 = vld [vmem:[%s361 + $0x30] sm:$0xff]
        %v430 = vld [vmem:[%s361 + $0x38] sm:$0xff]
        %v431 = vld [vmem:[%s409] sm:$0xff]
        %v432 = vmul.f32 %v415, %v414
        %v433 = vmul.f32 %v416, %v414
        %v434 = vmul.f32 %v417, %v414
        %v435 = vmul.f32 %v418, %v414
        %v436 = vmul.f32 %v419, %v414
        %v437 = vmul.f32 %v420, %v414
        %v438 = vmul.f32 %v421, %v414
        %v439 = vmul.f32 %v422, %v414
        %vm440 = vcmask 261120
        %v441 = vsel %vm440, %v432, 0.0
        %442 = vadd.xlane.f32.xlu0 %v441
        %v443 = vpop.xlane.xlu0 %442
        %v444 = vsel %vm440, %v433, 0.0
        %445 = vadd.xlane.f32.xlu0 %v444
        %v446 = vpop.xlane.xlu0 %445
        %v447 = vsel %vm440, %v434, 0.0
        %448 = vadd.xlane.f32.xlu0 %v447
        %v449 = vpop.xlane.xlu0 %448
        %v450 = vsel %vm440, %v435, 0.0
        %451 = vadd.xlane.f32.xlu0 %v450
        %v452 = vpop.xlane.xlu0 %451
        %v453 = vsel %vm440, %v436, 0.0
        %454 = vadd.xlane.f32.xlu0 %v453
        %v455 = vpop.xlane.xlu0 %454
        %v456 = vsel %vm440, %v437, 0.0
        %457 = vadd.xlane.f32.xlu0 %v456
        %v458 = vpop.xlane.xlu0 %457
        %v459 = vsel %vm440, %v438, 0.0
        %460 = vadd.xlane.f32.xlu0 %v459
        %v461 = vpop.xlane.xlu0 %460
        %v462 = vsel %vm440, %v439, 0.0
        %463 = vadd.xlane.f32.xlu0 %v462
        %v464 = vpop.xlane.xlu0 %463
        %v473 = vlaneseq
        %v474 = vand.u32 %v473, 127
        %v475 = vlaneseq
        %v476 = vshrl.u32 %v475, 7
        %v477 = vsub.s32 %v474, %v476
        %v478 = vrot.slane %v443, %v477
        %v479 = vlaneseq
        %v480 = vshrl.u32 %v479, 7
        %v481 = vsub.s32 %v474, %v480
        %v482 = vrot.slane %v446, %v481
        %v483 = vlaneseq
        %v484 = vshrl.u32 %v483, 7
        %v485 = vsub.s32 %v474, %v484
        %v486 = vrot.slane %v449, %v485
        %v487 = vlaneseq
        %v488 = vshrl.u32 %v487, 7
        %v489 = vsub.s32 %v474, %v488
        %v490 = vrot.slane %v452, %v489
        %v491 = vlaneseq
        %v492 = vshrl.u32 %v491, 7
        %v493 = vsub.s32 %v474, %v492
        %v494 = vrot.slane %v455, %v493
        %v495 = vlaneseq
        %v496 = vshrl.u32 %v495, 7
        %v497 = vsub.s32 %v474, %v496
        %v498 = vrot.slane %v458, %v497
        %v499 = vlaneseq
        %v500 = vshrl.u32 %v499, 7
        %v501 = vsub.s32 %v474, %v500
        %v502 = vrot.slane %v461, %v501
        %v503 = vlaneseq
        %v504 = vshrl.u32 %v503, 7
        %v505 = vsub.s32 %v474, %v504
        %v506 = vrot.slane %v464, %v505
        %vm507 = vcmask 1041409
        %v508 = vsel %vm507, %v482, %v478
        %vm509 = vcmask 1042434
        %v510 = vsel %vm509, %v486, %v508
        %vm511 = vcmask 1043459
        %v512 = vsel %vm511, %v490, %v510
        %vm513 = vcmask 1044484
        %v514 = vsel %vm513, %v494, %v512
        %vm515 = vcmask 1045509
        %v516 = vsel %vm515, %v498, %v514
        %vm517 = vcmask 1046534
        %v518 = vsel %vm517, %v502, %v516
        %vm519 = vcmask 1047559
        %v520 = vsel %vm519, %v506, %v518
        %522 = vxpose.xlu0.b32.start [1/16] %v520, 128
        %523 = vxpose.xlu0.b32.cont [2/16] 0.0, 128
        %524 = vxpose.xlu0.b32.cont [3/16] 0.0, 128
        %525 = vxpose.xlu0.b32.cont [4/16] 0.0, 128
        %526 = vxpose.xlu0.b32.cont [5/16] 0.0, 128
        %527 = vxpose.xlu0.b32.cont [6/16] 0.0, 128
        %528 = vxpose.xlu0.b32.cont [7/16] 0.0, 128
        %529 = vxpose.xlu0.b32.cont [8/16] 0.0, 128
        %530 = vxpose.xlu0.b32.cont [9/16] 0.0, 128
        %531 = vxpose.xlu0.b32.cont [10/16] 0.0, 128
        %532 = vxpose.xlu0.b32.cont [11/16] 0.0, 128
        %533 = vxpose.xlu0.b32.cont [12/16] 0.0, 128
        %534 = vxpose.xlu0.b32.cont [13/16] 0.0, 128
        %535 = vxpose.xlu0.b32.cont [14/16] 0.0, 128
        %536 = vxpose.xlu0.b32.cont [15/16] 0.0, 128
        %537 = vxpose.xlu0.b32.end [16/16] 0.0, 128
        %v538 = vpop.trf.xlu0
        %v539 = vpop.trf.xlu0
        %v540 = vpop.trf.xlu0
        %v541 = vpop.trf.xlu0
        %v542 = vpop.trf.xlu0
        %v543 = vpop.trf.xlu0
        %v544 = vpop.trf.xlu0
        %v545 = vpop.trf.xlu0
        %v546 = vpop.trf.xlu0
        %v547 = vpop.trf.xlu0
        %v548 = vpop.trf.xlu0
        %v549 = vpop.trf.xlu0
        %v550 = vpop.trf.xlu0
        %v551 = vpop.trf.xlu0
        %v552 = vpop.trf.xlu0
        %v553 = vpop.trf.xlu0
        %554 = vset.pattern.permute.xlu0 0
        %555 = vperm.xlu0 %554, %v431
        %v556 = vpop.permute.xlu0 %555
        %vm557 = vcmp.ge.s32.totalorder %v474, %v556
        %v558 = vsel %vm557, -1e+09, %v538
        %vm559 = vcmask 64512
        %v560 = vsel %vm559, %v558, -inf
        %561 = vmax.xlane.f32.xlu0 %v560
        %v562 = vpop.xlane.xlu0 %561
        %v563 = vsub.f32 %v558, %v562
        %v564 = vmul.f32 %v563, 1.442695
        %v565 = vpow.pop %v564
        %v566 = vsel %vm559, %v565, 0.0
        %567 = vadd.xlane.f32.xlu0 %v566
        %v568 = vpop.xlane.xlu0 %567
        %v569 = vrcp.pop %v568
        %v570 = vmul.f32 %v568, %v569
        %v571 = vsub.f32 2.0, %v570
        %v572 = vmul.f32 %v569, %v571
        %v573 = vmul.f32 %v565, %v572
        %574 = vxpose.xlu0.b32.start [1/16] %v573, 128
        %575 = vxpose.xlu0.b32.cont [2/16] 0.0, 128
        %576 = vxpose.xlu0.b32.cont [3/16] 0.0, 128
        %577 = vxpose.xlu0.b32.cont [4/16] 0.0, 128
        %578 = vxpose.xlu0.b32.cont [5/16] 0.0, 128
        %579 = vxpose.xlu0.b32.cont [6/16] 0.0, 128
        %580 = vxpose.xlu0.b32.cont [7/16] 0.0, 128
        %581 = vxpose.xlu0.b32.cont [8/16] 0.0, 128
        %582 = vxpose.xlu0.b32.cont [9/16] 0.0, 128
        %583 = vxpose.xlu0.b32.cont [10/16] 0.0, 128
        %584 = vxpose.xlu0.b32.cont [11/16] 0.0, 128
        %585 = vxpose.xlu0.b32.cont [12/16] 0.0, 128
        %586 = vxpose.xlu0.b32.cont [13/16] 0.0, 128
        %587 = vxpose.xlu0.b32.cont [14/16] 0.0, 128
        %588 = vxpose.xlu0.b32.cont [15/16] 0.0, 128
        %589 = vxpose.xlu0.b32.end [16/16] 0.0, 128
        %v590 = vpop.trf.xlu0
        %v591 = vpop.trf.xlu0
        %v592 = vpop.trf.xlu0
        %v593 = vpop.trf.xlu0
        %v594 = vpop.trf.xlu0
        %v595 = vpop.trf.xlu0
        %v596 = vpop.trf.xlu0
        %v597 = vpop.trf.xlu0
        %v598 = vpop.trf.xlu0
        %v599 = vpop.trf.xlu0
        %v600 = vpop.trf.xlu0
        %v601 = vpop.trf.xlu0
        %v602 = vpop.trf.xlu0
        %v603 = vpop.trf.xlu0
        %v604 = vpop.trf.xlu0
        %v605 = vpop.trf.xlu0
        %v606 = vlaneseq
        %v607 = vshrl.u32 %v606, 7
        %v608 = vsub.s32 0, %v607
        %v609 = vrot.slane %v590, %v608
        %611 = vbcast.lane.b32.xlu0 %v609, 256
        %v612 = vpop.permute.xlu0 %611
        %v613 = vlaneseq
        %v614 = vshrl.u32 %v613, 7
        %v615 = vsub.s32 1, %v614
        %v616 = vrot.slane %v590, %v615
        %618 = vbcast.lane.b32.xlu0 %v616, 256
        %v619 = vpop.permute.xlu0 %618
        %v620 = vlaneseq
        %v621 = vshrl.u32 %v620, 7
        %v622 = vsub.s32 2, %v621
        %v623 = vrot.slane %v590, %v622
        %625 = vbcast.lane.b32.xlu0 %v623, 256
        %v626 = vpop.permute.xlu0 %625
        %v627 = vlaneseq
        %v628 = vshrl.u32 %v627, 7
        %v629 = vsub.s32 3, %v628
        %v630 = vrot.slane %v590, %v629
        %632 = vbcast.lane.b32.xlu0 %v630, 256
        %v633 = vpop.permute.xlu0 %632
        %v634 = vlaneseq
        %v635 = vshrl.u32 %v634, 7
        %v636 = vsub.s32 4, %v635
        %v637 = vrot.slane %v590, %v636
        %639 = vbcast.lane.b32.xlu0 %v637, 256
        %v640 = vpop.permute.xlu0 %639
        %v641 = vlaneseq
        %v642 = vshrl.u32 %v641, 7
        %v643 = vsub.s32 5, %v642
        %v644 = vrot.slane %v590, %v643
        %646 = vbcast.lane.b32.xlu0 %v644, 256
        %v647 = vpop.permute.xlu0 %646
        %v648 = vlaneseq
        %v649 = vshrl.u32 %v648, 7
        %v650 = vsub.s32 6, %v649
        %v651 = vrot.slane %v590, %v650
        %653 = vbcast.lane.b32.xlu0 %v651, 256
        %v654 = vpop.permute.xlu0 %653
        %v655 = vlaneseq
        %v656 = vshrl.u32 %v655, 7
        %v657 = vsub.s32 7, %v656
        %v658 = vrot.slane %v590, %v657
        %660 = vbcast.lane.b32.xlu0 %v658, 256
        %v661 = vpop.permute.xlu0 %660
        %v662 = vmul.f32 %v612, %v423
        %v663 = vmul.f32 %v619, %v424
        %v664 = vmul.f32 %v626, %v425
        %v665 = vmul.f32 %v633, %v426
        %v666 = vmul.f32 %v640, %v427
        %v667 = vmul.f32 %v647, %v428
        %v668 = vmul.f32 %v654, %v429
        %v669 = vmul.f32 %v661, %v430
        %v670 = vsel %vm440, %v662, 0.0
        %v671 = vsel %vm440, %v663, 0.0
        %v672 = vadd.f32 %v670, %v671
        %v673 = vsel %vm440, %v664, 0.0
        %v674 = vadd.f32 %v672, %v673
        %v675 = vsel %vm440, %v665, 0.0
        %v676 = vadd.f32 %v674, %v675
        %v677 = vsel %vm440, %v666, 0.0
        %v678 = vadd.f32 %v676, %v677
        %v679 = vsel %vm440, %v667, 0.0
        %v680 = vadd.f32 %v678, %v679
        %v681 = vsel %vm440, %v668, 0.0
        %v682 = vadd.f32 %v680, %v681
        %v683 = vsel %vm440, %v669, 0.0
        %v684 = vadd.f32 %v682, %v683
        %685 = vst.msk [vmem:[%s413] sm:$0xff] %vm559, %v573
        %686 = vst.msk [vmem:[%s395] sm:$0xff] %vm440, %v684
        %s687 = sand.u32 %s132, 1
        %s688 = scalar_lea.sflag [#allocation5], %s687
        %s689 = sand.u32 %s132, 1
        %s690 = smul.addr %s689, 8
        %s691 = scalar_lea.vmem [#allocation4], %s690
        %p692 = scmp.lt.s32.totalorder %s20, 1
        %s693 = scalar_select %p692, %s20, 1
        %s694 = smul.addr %s693, 8
        %s695 = scalar_lea.vmem %s5, %s694
        // Predicated region
        $region113: #{attention.1} parent=103 // pred_check
          %p696 = pneg %p142
        $region114: #{attention.1} parent=103 // pred_check_branch
          %698 = sbr.rel (%p696) target = $region116
        $region115: #{attention.1} parent=103 // pred_region
          %s700 = ssub.s32 128, 128
          %701 = vsyncadd %s688, %s700
          %s702 = smul.addr %s20, 128
          %s703 = scalar_lea.hbm %s4, %s702
          %s705 = sshll.u32 %s691, 4
          %s706 = int_to_ptr.vmem [resolvable:$true] %s705
          %708 = dma.vmem_to_hbm [thread:$0]  %s706, 128, %s703, %s688
        $region116: #{attention.1} parent=103 // pred_fallthru
          _
        // Predicated region
        $region117: #{attention.1} parent=103 // pred_check
          %p709 = pneg %p168
        $region118: #{attention.1} parent=103 // pred_check_branch
          %711 = sbr.rel (%p709) target = $region120
        $region119: #{attention.1} parent=103 // pred_region
          _
        $region120: #{attention.1} parent=103 // pred_fallthru
          _
      $region104: #{attention.1} parent=5 // pred_fallthru
        _
      %p712 = scmp.le.s32.totalorder 2, %s15
      // Predicated region
      $region121: #{attention.1} parent=5 // pred_check
        %p713 = pneg %p712
      $region122: #{attention.1} parent=5 // pred_check_branch
        %715 = sbr.rel (%p713) target = $region124
      $region123: #{attention.1} parent=5 // pred_region
        %s716 = ssub.s32 %s15, 2
        // Predicated region
        $region125: #{attention.1} parent=123 // pred_check
          %p717 = pneg %p148
        $region126: #{attention.1} parent=123 // pred_check_branch
          %719 = sbr.rel (%p717) target = $region128
        $region127: #{attention.1} parent=123 // pred_region
          %s720 = sand.u32 %s133, 1
          %s721 = scalar_lea.sflag [#allocation5], %s720
          %s722 = sand.u32 %s133, 1
          %s723 = smul.addr %s722, 8
          %s724 = scalar_lea.vmem [#allocation4], %s723
          %725 = dma.done %s721, 128
        $region128: #{attention.1} parent=123 // pred_fallthru
          _
        // Predicated region
        $region129: #{attention.1} parent=123 // pred_check
          %p726 = pneg %p174
        $region130: #{attention.1} parent=123 // pred_check_branch
          %728 = sbr.rel (%p726) target = $region132
        $region131: #{attention.1} parent=123 // pred_region
          %p729 = scmp.lt.s32.totalorder %s21, 1
          %s730 = scalar_select %p729, %s21, 1
          %s731 = smul.addr %s730, 8
          %s732 = scalar_lea.vmem %s5, %s731
        $region132: #{attention.1} parent=123 // pred_fallthru
          _
      $region124: #{attention.1} parent=5 // pred_fallthru
        _
    $region6: #{attention.1} parent=1 // loop_footer
      %s19 = sadd.s32 1, %s15
    $region7: #{attention.1} parent=1 // loop_footer_branch
      %14 = sbr.rel target = $region3
    $region8: #{attention.1} parent=1 // loop_exit
      _
    %733 = vsyncpa [#allocation5], 1
    %s734 = scalar_lea.sflag [#allocation5], 1
    %735 = vsyncpa %s734, 1

</llo_original>
